<compile_context>
chip_gen: v5e
topology: v5e:2x2
jax: 0.10.0
libtpu: 0.0.40
codegen_flags: <defaults>
</compile_context>

<pallas_src>
import functools

import jax
import jax.numpy as jnp
from jax.experimental import pallas as pl
from jax.experimental.pallas import tpu as pltpu


def _round_up(x, m):
    return ((x + m - 1) // m) * m


def _krone_softmax_kernel(ea_ref, eb_ref, x_ref, out_ref, *, A, B, AB):
    # ea_ref: (A, ABp), eb_ref: (B, ABp) constant 0/1 expansion matrices (f32)
    # x_ref:  (2, bb, F) raw input tile; out_ref: (bb, ABp)
    ABp = out_ref.shape[-1]

    xa = x_ref[0][:, :A].astype(jnp.float32)             # (bb, A)
    xb = x_ref[1][:, :B].astype(jnp.float32)             # (bb, B)
    ea = ea_ref[...]                                      # (A, ABp), f32
    eb = eb_ref[...]                                      # (B, ABp), f32

    # Lane-dense Kronecker row via two tiny MXU expansions (exact in f32):
    #   (xa @ Ea)[i, a*B + b] = xa[i, a],  (xb @ Eb)[i, a*B + b] = xb[i, b]
    ya = jnp.dot(xa, ea, preferred_element_type=jnp.float32)   # (bb, ABp)
    yb = jnp.dot(xb, eb, preferred_element_type=jnp.float32)   # (bb, ABp)
    y = ya * yb                                                # (bb, ABp)

    # Factored row max (exact): max of xa[a]*xb[b] over (a, b) is attained at
    # the extremes of each factor -> only tiny reductions over A and B.
    a_max = jnp.max(xa, axis=1, keepdims=True)
    a_min = jnp.min(xa, axis=1, keepdims=True)
    b_max = jnp.max(xb, axis=1, keepdims=True)
    b_min = jnp.min(xb, axis=1, keepdims=True)
    m = jnp.maximum(
        jnp.maximum(a_max * b_max, a_max * b_min),
        jnp.maximum(a_min * b_max, a_min * b_min),
    )                                                      # (bb, 1)

    # Numerically stable softmax over the (lane-padded) Kronecker axis.
    e = jnp.exp(y - m)                                     # (bb, ABp)
    if ABp != AB:
        lane = jax.lax.broadcasted_iota(jnp.int32, (1, ABp), 1)
        e = jnp.where(lane < AB, e, 0.0)                   # zero padded lanes
    s = jnp.sum(e, axis=1, keepdims=True)                  # (bb, 1)
    inv_s = 1.0 / s                                        # exact; narrow column
    out_ref[...] = (e * inv_s).astype(out_ref.dtype)


def _expansion_matrices(A, B, ABp, dtype=jnp.float32):
    c = jnp.arange(ABp)
    valid = c < A * B
    ea = ((c[None, :] // B == jnp.arange(A)[:, None]) & valid[None, :]).astype(dtype)
    eb = ((c[None, :] % B == jnp.arange(B)[:, None]) & valid[None, :]).astype(dtype)
    return ea, eb                                          # (A, ABp), (B, ABp)


def krone_softmax(x, in_features_a, in_features_b, *, block_batch=None,
                  out_dtype=None):
    """KroneSoftmax forward.

    x: (2, batch, F) with F >= max(in_features_a, in_features_b).
    out_dtype: defaults to x.dtype (matches the PyTorch module).  Passing
      jnp.bfloat16 is the recommended perf setting: the kernel is HBM-write
      bound and accumulates in f32, so a bf16 output ~halves end-to-end time
      at ~3 significant digits of output precision.
    """
    A, B = in_features_a, in_features_b
    AB = A * B
    ABp = _round_up(AB, 128)                               # lane-dense output width
    two, batch, F = x.shape
    assert two == 2 and F >= max(A, B)
    out_dtype = x.dtype if out_dtype is None else jnp.dtype(out_dtype)
    in_isz = jnp.dtype(x.dtype).itemsize
    out_isz = jnp.dtype(out_dtype).itemsize

    # ---- VMEM capacity (v7x: 64 MiB/TC, v5e/v6e: 128 MiB) -------------------
    try:
        vmem_cap = int(pltpu.get_tpu_info().vmem_capacity_bytes)
    except Exception:
        vmem_cap = 64 << 20                                # v7x-conservative fallback
    vmem_budget = max(32 << 20, vmem_cap - (16 << 20))     # leave Mosaic headroom

    # Per-row VMEM bytes at peak (lane-padding aware):
    #   * output tile, double buffered (ABp lanes)
    #   * (2, bb, F) input tile, double buffered, lane-padded to >=128
    #   * ~4 live f32 (bb, ABp) intermediates (ya/yb/y, e, pre-cast out)
    fp = max(_round_up(F, 128), 128)
    per_row = 2 * ABp * out_isz + 2 * 2 * fp * in_isz + 4 * ABp * 4
    fixed = 4 << 20                                        # Ea/Eb + internal scratch

    # ---- Batch tile: ~8 MiB of output per step, clamped by the VMEM budget --
    if block_batch is None:
        bb_target = max(16, (8 << 20) // (ABp * out_isz))
        bb_vmem = max(16, (vmem_budget - fixed) // per_row)
        block_batch = max(16, min(bb_target, bb_vmem, 16384))
    bb = min(block_batch, _round_up(batch, 16))
    bb = max(16, (bb // 16) * 16)                          # sublane-packed for bf16 too

    # Prefer an even number of grid steps (v7x has 2 TCs sharing the "parallel"
    # batch axis); costs nothing on single-TC v5e/v6e.
    steps = pl.cdiv(batch, bb)
    if steps > 1 and steps % 2 == 1:
        steps += 1
        bb = max(16, _round_up(pl.cdiv(batch, steps), 16))
        steps = pl.cdiv(batch, bb)

    vmem_limit = int(min(max(per_row * bb + fixed, 32 << 20), vmem_cap - (8 << 20)))

    ea, eb = _expansion_matrices(A, B, ABp)

    kernel = functools.partial(_krone_softmax_kernel, A=A, B=B, AB=AB)
    out = pl.pallas_call(
        kernel,
        out_shape=jax.ShapeDtypeStruct((batch, ABp), out_dtype),
        grid=(steps,),
        in_specs=[
            pl.BlockSpec((A, ABp), lambda i: (0, 0)),      # Ea (resident constant)
            pl.BlockSpec((B, ABp), lambda i: (0, 0)),      # Eb (resident constant)
            pl.BlockSpec((2, bb, F), lambda i: (0, i, 0)), # raw x tile (no wrapper copy)
        ],
        out_specs=pl.BlockSpec((bb, ABp), lambda i: (i, 0)),
        compiler_params=pltpu.CompilerParams(
            dimension_semantics=("parallel",),
            vmem_limit_bytes=vmem_limit,
        ),
    )(ea, eb, x)

    if ABp != AB:
        out = out[:, :AB]                                  # drop lane padding only
    return out


if __name__ == "__main__":
    # Shapes consistent with the module's forward: x is (2, batch, F),
    # in_features_a=16, in_features_b=8 -> A*B = 128.
    in_features_a = 16
    in_features_b = 8
    batch = 64
    feat = 16  # F >= max(A, B)

    key = jax.random.PRNGKey(0)
    x = jax.random.normal(key, (2, batch, feat), dtype=jnp.float32)

    # Default (f32) output: exact parity with the reference.
    out = jax.block_until_ready(krone_softmax(x, in_features_a, in_features_b))

    x_a = x[0][:, :in_features_a]
    x_b = x[1][:, :in_features_b]
    y_ref = (x_a[:, :, None] * x_b[:, None, :]).reshape(
        batch, in_features_a * in_features_b)
    ref = jax.nn.softmax(y_ref, axis=1)

    assert out.shape == (batch, in_features_a * in_features_b)
    assert out.dtype == x.dtype
    assert jnp.allclose(out, ref, rtol=1e-4, atol=1e-6), float(
        jnp.max(jnp.abs(out - ref)))

    # Recommended perf setting: bf16 output (halves the dominant HBM write).
    out_bf16 = jax.block_until_ready(
        krone_softmax(x, in_features_a, in_features_b, out_dtype=jnp.bfloat16))
    assert out_bf16.dtype == jnp.bfloat16
    assert jnp.allclose(out_bf16.astype(jnp.float32), ref, rtol=3e-2, atol=2e-3)

    # Non-multiple-of-128 Kronecker axis (exercises in-kernel lane padding/mask).
    A2, B2 = 10, 7
    out2 = jax.block_until_ready(krone_softmax(x, A2, B2))
    y2 = (x[0][:, :A2][:, :, None] * x[1][:, :B2][:, None, :]).reshape(batch, A2 * B2)
    ref2 = jax.nn.softmax(y2, axis=1)
    assert out2.shape == (batch, A2 * B2)
    assert jnp.allclose(out2, ref2, rtol=1e-4, atol=1e-6), float(
        jnp.max(jnp.abs(out2 - ref2)))

    print("KERNEL_OK")
</pallas_src>

<mosaic_0001>
module attributes {stable_mosaic.version = 11 : i64} {
  func.func @_krone_softmax_kernel(%arg0: i32, %arg1: memref<16x128xf32, #tpu.memory_space<vmem>>, %arg2: memref<8x128xf32, #tpu.memory_space<vmem>>, %arg3: memref<2x64x16xf32, #tpu.memory_space<vmem>>, %arg4: memref<64x128xf32, #tpu.memory_space<vmem>>) attributes {dimension_semantics = [#tpu.dimension_semantics<parallel>], iteration_bounds = array<i64: 1>, scalar_prefetch = 0 : i64, scratch_operands = 0 : i64, tpu.core_type = #tpu.core_type<tc>, window_params = [{pipeline_mode = #tpu.pipeline_mode<synchronous>, transform_indices = @transform_0, window_bounds = array<i64: 16, 128>}, {pipeline_mode = #tpu.pipeline_mode<synchronous>, transform_indices = @transform_1, window_bounds = array<i64: 8, 128>}, {transform_indices = @transform_2, window_bounds = array<i64: 2, 64, 16>}, {transform_indices = @transform_3, window_bounds = array<i64: 64, 128>}]} {
    %c0 = arith.constant 0 : index
    %c0_0 = arith.constant 0 : index
    %c0_1 = arith.constant 0 : index
    %0 = vector.load %arg3[%c0, %c0_0, %c0_1] : memref<2x64x16xf32, #tpu.memory_space<vmem>>, vector<1x64x16xf32>
    %1 = vector.shape_cast %0 : vector<1x64x16xf32> to vector<64x16xf32>
    %c1 = arith.constant 1 : index
    %c0_2 = arith.constant 0 : index
    %c0_3 = arith.constant 0 : index
    %2 = vector.load %arg3[%c1, %c0_2, %c0_3] : memref<2x64x16xf32, #tpu.memory_space<vmem>>, vector<1x64x16xf32>
    %3 = vector.shape_cast %2 : vector<1x64x16xf32> to vector<64x16xf32>
    %4 = vector.extract_strided_slice %3 {offsets = [0, 0], sizes = [64, 8], strides = [1, 1]} : vector<64x16xf32> to vector<64x8xf32>
    %c0_4 = arith.constant 0 : index
    %c0_5 = arith.constant 0 : index
    %5 = vector.load %arg1[%c0_4, %c0_5] : memref<16x128xf32, #tpu.memory_space<vmem>>, vector<16x128xf32>
    %c0_6 = arith.constant 0 : index
    %c0_7 = arith.constant 0 : index
    %6 = vector.load %arg2[%c0_6, %c0_7] : memref<8x128xf32, #tpu.memory_space<vmem>>, vector<8x128xf32>
    %cst = arith.constant dense<0.000000e+00> : vector<64x128xf32>
    %7 = tpu.matmul %1, %5, %cst {dimension_numbers = #tpu.dot_dimension_numbers<[1], [0], [0], [1], [0, 0, 1, 1], [], []>} : vector<64x16xf32>, vector<16x128xf32>, vector<64x128xf32> -> vector<64x128xf32>
    %cst_8 = arith.constant dense<0.000000e+00> : vector<64x128xf32>
    %8 = tpu.matmul %4, %6, %cst_8 {dimension_numbers = #tpu.dot_dimension_numbers<[1], [0], [0], [1], [0, 0, 1, 1], [], []>} : vector<64x8xf32>, vector<8x128xf32>, vector<64x128xf32> -> vector<64x128xf32>
    %9 = arith.mulf %7, %8 : vector<64x128xf32>
    %cst_9 = arith.constant dense<0xFF800000> : vector<64xf32>
    %10 = vector.multi_reduction <maximumf>, %1, %cst_9 [1] : vector<64x16xf32> to vector<64xf32>
    %11 = vector.shape_cast %10 : vector<64xf32> to vector<64x1xf32>
    %cst_10 = arith.constant dense<0x7F800000> : vector<64xf32>
    %12 = vector.multi_reduction <minimumf>, %1, %cst_10 [1] : vector<64x16xf32> to vector<64xf32>
    %13 = vector.shape_cast %12 : vector<64xf32> to vector<64x1xf32>
    %cst_11 = arith.constant dense<0xFF800000> : vector<64xf32>
    %14 = vector.multi_reduction <maximumf>, %4, %cst_11 [1] : vector<64x8xf32> to vector<64xf32>
    %15 = vector.shape_cast %14 : vector<64xf32> to vector<64x1xf32>
    %cst_12 = arith.constant dense<0x7F800000> : vector<64xf32>
    %16 = vector.multi_reduction <minimumf>, %4, %cst_12 [1] : vector<64x8xf32> to vector<64xf32>
    %17 = vector.shape_cast %16 : vector<64xf32> to vector<64x1xf32>
    %18 = arith.mulf %11, %15 : vector<64x1xf32>
    %19 = arith.mulf %11, %17 : vector<64x1xf32>
    %20 = arith.maximumf %18, %19 : vector<64x1xf32>
    %21 = arith.mulf %13, %15 : vector<64x1xf32>
    %22 = arith.mulf %13, %17 : vector<64x1xf32>
    %23 = arith.maximumf %21, %22 : vector<64x1xf32>
    %24 = arith.maximumf %20, %23 : vector<64x1xf32>
    %25 = vector.broadcast %24 : vector<64x1xf32> to vector<64x128xf32>
    %26 = arith.subf %9, %25 : vector<64x128xf32>
    %27 = math.exp %26 : vector<64x128xf32>
    %cst_13 = arith.constant dense<0.000000e+00> : vector<64xf32>
    %28 = vector.multi_reduction <add>, %27, %cst_13 [1] : vector<64x128xf32> to vector<64xf32>
    %29 = vector.shape_cast %28 : vector<64xf32> to vector<64x1xf32>
    %cst_14 = arith.constant 1.000000e+00 : f32
    %30 = vector.broadcast %cst_14 : f32 to vector<64x1xf32>
    %31 = arith.divf %30, %29 : vector<64x1xf32>
    %32 = vector.broadcast %31 : vector<64x1xf32> to vector<64x128xf32>
    %33 = arith.mulf %27, %32 : vector<64x128xf32>
    %c0_15 = arith.constant 0 : index
    %c0_16 = arith.constant 0 : index
    %34 = vector.load %arg4[%c0_15, %c0_16] : memref<64x128xf32, #tpu.memory_space<vmem>>, vector<64x128xf32>
    tpu.vector_store %arg4[%c0_15, %c0_16], %33 {strides = array<i32>} : memref<64x128xf32, #tpu.memory_space<vmem>>, vector<64x128xf32>,
    return
  }
  func.func @transform_0(%arg0: i32) -> (i32, i32) {
    %c0_i32 = arith.constant 0 : i32
    %c0_i32_0 = arith.constant 0 : i32
    %c0_i32_1 = arith.constant 0 : i32
    return %c0_i32, %c0_i32_0 : i32, i32
  }
  func.func @transform_1(%arg0: i32) -> (i32, i32) {
    %c0_i32 = arith.constant 0 : i32
    %c0_i32_0 = arith.constant 0 : i32
    %c0_i32_1 = arith.constant 0 : i32
    return %c0_i32, %c0_i32_0 : i32, i32
  }
  func.func @transform_2(%arg0: i32) -> (i32, i32, i32) {
    %c0_i32 = arith.constant 0 : i32
    %c0_i32_0 = arith.constant 0 : i32
    %c0_i32_1 = arith.constant 0 : i32
    return %c0_i32, %arg0, %c0_i32_0 : i32, i32, i32
  }
  func.func @transform_3(%arg0: i32) -> (i32, i32) {
    %c0_i32 = arith.constant 0 : i32
    %c0_i32_0 = arith.constant 0 : i32
    return %arg0, %c0_i32 : i32, i32
  }
}

</mosaic_0001>

<llo_original>
// kernel: tpu_custom_call.1
$region0: #{tpu_custom_call.1}
  #allocation0 [shape = 'u32[]', space=smem, size = 0x4, offset = 0x4, fixed_abs, tag = 'smem constant byte address 0x4 - core index']
  #allocation1 [shape = 'u32[72,128]{1,0:T(1,128)}', space=vmem, size = 0x9000, scoped, tag = 'internal scratch']
  %s0 = inlined_call_operand.vmem [shape: f32[16,128], index: 0, kind: input, shape index: {}]
  %s1 = inlined_call_operand.vmem [shape: f32[8,128], index: 1, kind: input, shape index: {}]
  %s2 = inlined_call_operand.vmem [shape: f32[2,64,16], index: 2, kind: input, shape index: {}]
  %s3 = inlined_call_operand.hbm [shape: f32[64,128], index: 3, kind: output, shape index: {}]
  %s4 = sld [smem:[#allocation0]]
  $region22: #{tpu_custom_call.1} parent=0
    _
  %s6 = ssub.s32 1, %s4
  %s7 = scalar_select 0, %s6, %s4
  $region1: #{tpu_custom_call.1} parent=0
    #allocation2 [shape = 'u8[32768]{0}', space=vmem, size = 0x8000, scoped, tag = 'output window, operand 0, single buffered']
    #allocation3 [shape = 's32[1]{0}', space=sflag, size = 0x4, scoped, tag = 'scoped memory for tpu_custom_call.1']
    %8 = vsyncpa [#allocation3], 0
    // Predicated region
    $region2: #{tpu_custom_call.1} parent=1 // pred_check
      _
    $region3: #{tpu_custom_call.1} parent=1 // pred_check_branch
      %10 = sbr.rel (0) target = $region5
    $region4: #{tpu_custom_call.1} parent=1 // pred_region
      _
    $region5: #{tpu_custom_call.1} parent=1 // pred_fallthru
      _
    // Predicated region
    $region6: #{tpu_custom_call.1} parent=1 // pred_check
      _
    $region7: #{tpu_custom_call.1} parent=1 // pred_check_branch
      %12 = sbr.rel (0) target = $region9
    $region8: #{tpu_custom_call.1} parent=1 // pred_region
      _
    $region9: #{tpu_custom_call.1} parent=1 // pred_fallthru
      _
    // Predicated region
    $region10: #{tpu_custom_call.1} parent=1 // pred_check
      _
    $region11: #{tpu_custom_call.1} parent=1 // pred_check_branch
      %14 = sbr.rel (0) target = $region13
    $region12: #{tpu_custom_call.1} parent=1 // pred_region
      _
    $region13: #{tpu_custom_call.1} parent=1 // pred_fallthru
      _
    %v15 = vld [vmem:[%s2] sm:$0xff]
    %v16 = vld [vmem:[%s2 + $0x8] sm:$0xff]
    %v17 = vld [vmem:[%s2 + $0x10] sm:$0xff]
    %v18 = vld [vmem:[%s2 + $0x18] sm:$0xff]
    %v19 = vld [vmem:[%s2 + $0x20] sm:$0xff]
    %v20 = vld [vmem:[%s2 + $0x28] sm:$0xff]
    %v21 = vld [vmem:[%s2 + $0x30] sm:$0xff]
    %v22 = vld [vmem:[%s2 + $0x38] sm:$0xff]
    %s23 = scalar_lea.vmem %s2, 64
    %v24 = vld [vmem:[%s23] sm:$0xff]
    %v25 = vld [vmem:[%s23 + $0x8] sm:$0xff]
    %v26 = vld [vmem:[%s23 + $0x10] sm:$0xff]
    %v27 = vld [vmem:[%s23 + $0x18] sm:$0xff]
    %v28 = vld [vmem:[%s23 + $0x20] sm:$0xff]
    %v29 = vld [vmem:[%s23 + $0x28] sm:$0xff]
    %v30 = vld [vmem:[%s23 + $0x30] sm:$0xff]
    %v31 = vld [vmem:[%s23 + $0x38] sm:$0xff]
    %v32 = vld [vmem:[%s0] sm:$0xff]
    %v33 = vld [vmem:[%s0 + $0x8] sm:$0xff]
    %v34 = vld [vmem:[%s1] sm:$0xff]
    %vm35 = vcmask 130048
    %v37 = vsel %vm35, %v15, 0
    %v40 = vsel %vm35, %v16, 0
    %v43 = vsel %vm35, %v17, 0
    %v46 = vsel %vm35, %v18, 0
    %v49 = vsel %vm35, %v19, 0
    %v52 = vsel %vm35, %v20, 0
    %v55 = vsel %vm35, %v21, 0
    %v58 = vsel %vm35, %v22, 0
    %60 = vmatpush.msra.mxu0 0.0
    %61 = vmatpush.msra.mxu0 0.0
    %62 = vmatpush.msra.mxu0 0.0
    %63 = vmatpush.msra.mxu0 0.0
    %64 = vmatpush.msra.mxu0 0.0
    %65 = vmatpush.msra.mxu0 0.0
    %66 = vmatpush.msra.mxu0 0.0
    %67 = vmatpush.msra.mxu0 0.0
    %68 = vmatpush.msra.mxu0 0.0
    %69 = vmatpush.msra.mxu0 0.0
    %70 = vmatpush.msra.mxu0 0.0
    %71 = vmatpush.msra.mxu0 0.0
    %72 = vmatpush.msra.mxu0 0.0
    %73 = vmatpush.msra.mxu0 0.0
    %74 = vmatpush.msra.mxu0 %v33
    %75 = vmatpush.msra.mxu0 %v32
    %76 = vmatmul.f32.gmra.mxu0 %v37
    %v77 = vpop.f32.mrf.mxu0
    %v78 = vadd.f32 0.0, %v77
    %79 = vmatmul.f32.gmra.mxu0 %v40
    %v80 = vpop.f32.mrf.mxu0
    %v81 = vadd.f32 0.0, %v80
    %82 = vmatmul.f32.gmra.mxu0 %v43
    %v83 = vpop.f32.mrf.mxu0
    %v84 = vadd.f32 0.0, %v83
    %85 = vmatmul.f32.gmra.mxu0 %v46
    %v86 = vpop.f32.mrf.mxu0
    %v87 = vadd.f32 0.0, %v86
    %88 = vmatmul.f32.gmra.mxu0 %v49
    %v89 = vpop.f32.mrf.mxu0
    %v90 = vadd.f32 0.0, %v89
    %91 = vmatmul.f32.gmra.mxu0 %v52
    %v92 = vpop.f32.mrf.mxu0
    %v93 = vadd.f32 0.0, %v92
    %94 = vmatmul.f32.gmra.mxu0 %v55
    %v95 = vpop.f32.mrf.mxu0
    %v96 = vadd.f32 0.0, %v95
    %97 = vmatmul.f32.gmra.mxu0 %v58
    %v98 = vpop.f32.mrf.mxu0
    %v99 = vadd.f32 0.0, %v98
    %100 = vdwg.mxu0
    %vm101 = vcmask 64512
    %v103 = vsel %vm101, %v24, 0
    %v106 = vsel %vm101, %v25, 0
    %v109 = vsel %vm101, %v26, 0
    %v112 = vsel %vm101, %v27, 0
    %v115 = vsel %vm101, %v28, 0
    %v118 = vsel %vm101, %v29, 0
    %v121 = vsel %vm101, %v30, 0
    %v124 = vsel %vm101, %v31, 0
    %126 = vmatpush.msra.mxu0 0.0
    %127 = vmatpush.msra.mxu0 0.0
    %128 = vmatpush.msra.mxu0 0.0
    %129 = vmatpush.msra.mxu0 0.0
    %130 = vmatpush.msra.mxu0 0.0
    %131 = vmatpush.msra.mxu0 0.0
    %132 = vmatpush.msra.mxu0 0.0
    %133 = vmatpush.msra.mxu0 0.0
    %134 = vmatpush.msra.mxu0 0.0
    %135 = vmatpush.msra.mxu0 0.0
    %136 = vmatpush.msra.mxu0 0.0
    %137 = vmatpush.msra.mxu0 0.0
    %138 = vmatpush.msra.mxu0 0.0
    %139 = vmatpush.msra.mxu0 0.0
    %140 = vmatpush.msra.mxu0 0.0
    %141 = vmatpush.msra.mxu0 %v34
    %142 = vmatmul.f32.gmra.mxu0 %v103
    %v143 = vpop.f32.mrf.mxu0
    %v144 = vadd.f32 0.0, %v143
    %145 = vmatmul.f32.gmra.mxu0 %v106
    %v146 = vpop.f32.mrf.mxu0
    %v147 = vadd.f32 0.0, %v146
    %148 = vmatmul.f32.gmra.mxu0 %v109
    %v149 = vpop.f32.mrf.mxu0
    %v150 = vadd.f32 0.0, %v149
    %151 = vmatmul.f32.gmra.mxu0 %v112
    %v152 = vpop.f32.mrf.mxu0
    %v153 = vadd.f32 0.0, %v152
    %154 = vmatmul.f32.gmra.mxu0 %v115
    %v155 = vpop.f32.mrf.mxu0
    %v156 = vadd.f32 0.0, %v155
    %157 = vmatmul.f32.gmra.mxu0 %v118
    %v158 = vpop.f32.mrf.mxu0
    %v159 = vadd.f32 0.0, %v158
    %160 = vmatmul.f32.gmra.mxu0 %v121
    %v161 = vpop.f32.mrf.mxu0
    %v162 = vadd.f32 0.0, %v161
    %163 = vmatmul.f32.gmra.mxu0 %v124
    %v164 = vpop.f32.mrf.mxu0
    %v165 = vadd.f32 0.0, %v164
    %166 = vdwg.mxu0
    %v167 = vmul.f32 %v78, %v144
    %v168 = vmul.f32 %v81, %v147
    %v169 = vmul.f32 %v84, %v150
    %v170 = vmul.f32 %v87, %v153
    %v171 = vmul.f32 %v90, %v156
    %v172 = vmul.f32 %v93, %v159
    %v173 = vmul.f32 %v96, %v162
    %v174 = vmul.f32 %v99, %v165
    %v175 = vsel %vm35, %v15, -inf
    %176 = vmax.xlane.f32.xlu0 %v175
    %v177 = vpop.xlane.xlu0 %176
    %v178 = vsel %vm35, %v16, -inf
    %179 = vmax.xlane.f32.xlu0 %v178
    %v180 = vpop.xlane.xlu0 %179
    %v181 = vsel %vm35, %v17, -inf
    %182 = vmax.xlane.f32.xlu0 %v181
    %v183 = vpop.xlane.xlu0 %182
    %v184 = vsel %vm35, %v18, -inf
    %185 = vmax.xlane.f32.xlu0 %v184
    %v186 = vpop.xlane.xlu0 %185
    %v187 = vsel %vm35, %v19, -inf
    %188 = vmax.xlane.f32.xlu0 %v187
    %v189 = vpop.xlane.xlu0 %188
    %v190 = vsel %vm35, %v20, -inf
    %191 = vmax.xlane.f32.xlu0 %v190
    %v192 = vpop.xlane.xlu0 %191
    %v193 = vsel %vm35, %v21, -inf
    %194 = vmax.xlane.f32.xlu0 %v193
    %v195 = vpop.xlane.xlu0 %194
    %v196 = vsel %vm35, %v22, -inf
    %197 = vmax.xlane.f32.xlu0 %v196
    %v198 = vpop.xlane.xlu0 %197
    %v199 = vsel %vm35, %v15, inf
    %200 = vmin.xlane.f32.xlu0 %v199
    %v201 = vpop.xlane.xlu0 %200
    %v202 = vsel %vm35, %v16, inf
    %203 = vmin.xlane.f32.xlu0 %v202
    %v204 = vpop.xlane.xlu0 %203
    %v205 = vsel %vm35, %v17, inf
    %206 = vmin.xlane.f32.xlu0 %v205
    %v207 = vpop.xlane.xlu0 %206
    %v208 = vsel %vm35, %v18, inf
    %209 = vmin.xlane.f32.xlu0 %v208
    %v210 = vpop.xlane.xlu0 %209
    %v211 = vsel %vm35, %v19, inf
    %212 = vmin.xlane.f32.xlu0 %v211
    %v213 = vpop.xlane.xlu0 %212
    %v214 = vsel %vm35, %v20, inf
    %215 = vmin.xlane.f32.xlu0 %v214
    %v216 = vpop.xlane.xlu0 %215
    %v217 = vsel %vm35, %v21, inf
    %218 = vmin.xlane.f32.xlu0 %v217
    %v219 = vpop.xlane.xlu0 %218
    %v220 = vsel %vm35, %v22, inf
    %221 = vmin.xlane.f32.xlu0 %v220
    %v222 = vpop.xlane.xlu0 %221
    %v223 = vsel %vm101, %v24, -inf
    %224 = vmax.xlane.f32.xlu0 %v223
    %v225 = vpop.xlane.xlu0 %224
    %v226 = vsel %vm101, %v25, -inf
    %227 = vmax.xlane.f32.xlu0 %v226
    %v228 = vpop.xlane.xlu0 %227
    %v229 = vsel %vm101, %v26, -inf
    %230 = vmax.xlane.f32.xlu0 %v229
    %v231 = vpop.xlane.xlu0 %230
    %v232 = vsel %vm101, %v27, -inf
    %233 = vmax.xlane.f32.xlu0 %v232
    %v234 = vpop.xlane.xlu0 %233
    %v235 = vsel %vm101, %v28, -inf
    %236 = vmax.xlane.f32.xlu0 %v235
    %v237 = vpop.xlane.xlu0 %236
    %v238 = vsel %vm101, %v29, -inf
    %239 = vmax.xlane.f32.xlu0 %v238
    %v240 = vpop.xlane.xlu0 %239
    %v241 = vsel %vm101, %v30, -inf
    %242 = vmax.xlane.f32.xlu0 %v241
    %v243 = vpop.xlane.xlu0 %242
    %v244 = vsel %vm101, %v31, -inf
    %245 = vmax.xlane.f32.xlu0 %v244
    %v246 = vpop.xlane.xlu0 %245
    %v247 = vsel %vm101, %v24, inf
    %248 = vmin.xlane.f32.xlu0 %v247
    %v249 = vpop.xlane.xlu0 %248
    %v250 = vsel %vm101, %v25, inf
    %251 = vmin.xlane.f32.xlu0 %v250
    %v252 = vpop.xlane.xlu0 %251
    %v253 = vsel %vm101, %v26, inf
    %254 = vmin.xlane.f32.xlu0 %v253
    %v255 = vpop.xlane.xlu0 %254
    %v256 = vsel %vm101, %v27, inf
    %257 = vmin.xlane.f32.xlu0 %v256
    %v258 = vpop.xlane.xlu0 %257
    %v259 = vsel %vm101, %v28, inf
    %260 = vmin.xlane.f32.xlu0 %v259
    %v261 = vpop.xlane.xlu0 %260
    %v262 = vsel %vm101, %v29, inf
    %263 = vmin.xlane.f32.xlu0 %v262
    %v264 = vpop.xlane.xlu0 %263
    %v265 = vsel %vm101, %v30, inf
    %266 = vmin.xlane.f32.xlu0 %v265
    %v267 = vpop.xlane.xlu0 %266
    %v268 = vsel %vm101, %v31, inf
    %269 = vmin.xlane.f32.xlu0 %v268
    %v270 = vpop.xlane.xlu0 %269
    %v271 = vmul.f32 %v177, %v225
    %v272 = vmul.f32 %v180, %v228
    %v273 = vmul.f32 %v183, %v231
    %v274 = vmul.f32 %v186, %v234
    %v275 = vmul.f32 %v189, %v237
    %v276 = vmul.f32 %v192, %v240
    %v277 = vmul.f32 %v195, %v243
    %v278 = vmul.f32 %v198, %v246
    %v279 = vmul.f32 %v177, %v249
    %v280 = vmul.f32 %v180, %v252
    %v281 = vmul.f32 %v183, %v255
    %v282 = vmul.f32 %v186, %v258
    %v283 = vmul.f32 %v189, %v261
    %v284 = vmul.f32 %v192, %v264
    %v285 = vmul.f32 %v195, %v267
    %v286 = vmul.f32 %v198, %v270
    %v287 = vmax.f32 %v271, %v279
    %v288 = vmax.f32 %v272, %v280
    %v289 = vmax.f32 %v273, %v281
    %v290 = vmax.f32 %v274, %v282
    %v291 = vmax.f32 %v275, %v283
    %v292 = vmax.f32 %v276, %v284
    %v293 = vmax.f32 %v277, %v285
    %v294 = vmax.f32 %v278, %v286
    %v295 = vmul.f32 %v201, %v225
    %v296 = vmul.f32 %v204, %v228
    %v297 = vmul.f32 %v207, %v231
    %v298 = vmul.f32 %v210, %v234
    %v299 = vmul.f32 %v213, %v237
    %v300 = vmul.f32 %v216, %v240
    %v301 = vmul.f32 %v219, %v243
    %v302 = vmul.f32 %v222, %v246
    %v303 = vmul.f32 %v201, %v249
    %v304 = vmul.f32 %v204, %v252
    %v305 = vmul.f32 %v207, %v255
    %v306 = vmul.f32 %v210, %v258
    %v307 = vmul.f32 %v213, %v261
    %v308 = vmul.f32 %v216, %v264
    %v309 = vmul.f32 %v219, %v267
    %v310 = vmul.f32 %v222, %v270
    %v311 = vmax.f32 %v295, %v303
    %v312 = vmax.f32 %v296, %v304
    %v313 = vmax.f32 %v297, %v305
    %v314 = vmax.f32 %v298, %v306
    %v315 = vmax.f32 %v299, %v307
    %v316 = vmax.f32 %v300, %v308
    %v317 = vmax.f32 %v301, %v309
    %v318 = vmax.f32 %v302, %v310
    %v319 = vmax.f32 %v287, %v311
    %v320 = vmax.f32 %v288, %v312
    %v321 = vmax.f32 %v289, %v313
    %v322 = vmax.f32 %v290, %v314
    %v323 = vmax.f32 %v291, %v315
    %v324 = vmax.f32 %v292, %v316
    %v325 = vmax.f32 %v293, %v317
    %v326 = vmax.f32 %v294, %v318
    %v327 = vsub.f32 %v167, %v319
    %v328 = vsub.f32 %v168, %v320
    %v329 = vsub.f32 %v169, %v321
    %v330 = vsub.f32 %v170, %v322
    %v331 = vsub.f32 %v171, %v323
    %v332 = vsub.f32 %v172, %v324
    %v333 = vsub.f32 %v173, %v325
    %v334 = vsub.f32 %v174, %v326
    %v335 = vmul.f32 %v327, 1.442695
    %v336 = vpow.pop %v335
    %v337 = vmul.f32 %v328, 1.442695
    %v338 = vpow.pop %v337
    %v339 = vmul.f32 %v329, 1.442695
    %v340 = vpow.pop %v339
    %v341 = vmul.f32 %v330, 1.442695
    %v342 = vpow.pop %v341
    %v343 = vmul.f32 %v331, 1.442695
    %v344 = vpow.pop %v343
    %v345 = vmul.f32 %v332, 1.442695
    %v346 = vpow.pop %v345
    %v347 = vmul.f32 %v333, 1.442695
    %v348 = vpow.pop %v347
    %v349 = vmul.f32 %v334, 1.442695
    %v350 = vpow.pop %v349
    %351 = vadd.xlane.f32.xlu0 %v336
    %v352 = vpop.xlane.xlu0 %351
    %353 = vadd.xlane.f32.xlu0 %v338
    %v354 = vpop.xlane.xlu0 %353
    %355 = vadd.xlane.f32.xlu0 %v340
    %v356 = vpop.xlane.xlu0 %355
    %357 = vadd.xlane.f32.xlu0 %v342
    %v358 = vpop.xlane.xlu0 %357
    %359 = vadd.xlane.f32.xlu0 %v344
    %v360 = vpop.xlane.xlu0 %359
    %361 = vadd.xlane.f32.xlu0 %v346
    %v362 = vpop.xlane.xlu0 %361
    %363 = vadd.xlane.f32.xlu0 %v348
    %v364 = vpop.xlane.xlu0 %363
    %365 = vadd.xlane.f32.xlu0 %v350
    %v366 = vpop.xlane.xlu0 %365
    %v367 = vrcp.pop %v352
    %v368 = vmul.f32 %v352, %v367
    %v369 = vsub.f32 1.0, %v368
    %v370 = vmul.f32 %v367, %v369
    %v371 = vadd.f32 %v367, %v370
    %vm372 = vweird.f32 %v352
    %vm373 = vweird.f32 %v367
    %vm374 = vmor %vm372, %vm373
    %v375 = vsel %vm374, %v367, %v371
    %v376 = vand.u32 2147483647, %v352
    %vm377 = vcmp.eq.f32.partialorder %v376, 8.507059e+37
    %v378 = vand.u32 %v352, 2147483648
    %v379 = vor.u32 1.1754944e-38, %v378
    %v380 = vsel %vm377, %v379, %v375
    %v381 = vmul.f32 1.0, %v380
    %v382 = vrcp.pop %v354
    %v383 = vmul.f32 %v354, %v382
    %v384 = vsub.f32 1.0, %v383
    %v385 = vmul.f32 %v382, %v384
    %v386 = vadd.f32 %v382, %v385
    %vm387 = vweird.f32 %v354
    %vm388 = vweird.f32 %v382
    %vm389 = vmor %vm387, %vm388
    %v390 = vsel %vm389, %v382, %v386
    %v391 = vand.u32 2147483647, %v354
    %vm392 = vcmp.eq.f32.partialorder %v391, 8.507059e+37
    %v393 = vand.u32 %v354, 2147483648
    %v394 = vor.u32 1.1754944e-38, %v393
    %v395 = vsel %vm392, %v394, %v390
    %v396 = vmul.f32 1.0, %v395
    %v397 = vrcp.pop %v356
    %v398 = vmul.f32 %v356, %v397
    %v399 = vsub.f32 1.0, %v398
    %v400 = vmul.f32 %v397, %v399
    %v401 = vadd.f32 %v397, %v400
    %vm402 = vweird.f32 %v356
    %vm403 = vweird.f32 %v397
    %vm404 = vmor %vm402, %vm403
    %v405 = vsel %vm404, %v397, %v401
    %v406 = vand.u32 2147483647, %v356
    %vm407 = vcmp.eq.f32.partialorder %v406, 8.507059e+37
    %v408 = vand.u32 %v356, 2147483648
    %v409 = vor.u32 1.1754944e-38, %v408
    %v410 = vsel %vm407, %v409, %v405
    %v411 = vmul.f32 1.0, %v410
    %v412 = vrcp.pop %v358
    %v413 = vmul.f32 %v358, %v412
    %v414 = vsub.f32 1.0, %v413
    %v415 = vmul.f32 %v412, %v414
    %v416 = vadd.f32 %v412, %v415
    %vm417 = vweird.f32 %v358
    %vm418 = vweird.f32 %v412
    %vm419 = vmor %vm417, %vm418
    %v420 = vsel %vm419, %v412, %v416
    %v421 = vand.u32 2147483647, %v358
    %vm422 = vcmp.eq.f32.partialorder %v421, 8.507059e+37
    %v423 = vand.u32 %v358, 2147483648
    %v424 = vor.u32 1.1754944e-38, %v423
    %v425 = vsel %vm422, %v424, %v420
    %v426 = vmul.f32 1.0, %v425
    %v427 = vrcp.pop %v360
    %v428 = vmul.f32 %v360, %v427
    %v429 = vsub.f32 1.0, %v428
    %v430 = vmul.f32 %v427, %v429
    %v431 = vadd.f32 %v427, %v430
    %vm432 = vweird.f32 %v360
    %vm433 = vweird.f32 %v427
    %vm434 = vmor %vm432, %vm433
    %v435 = vsel %vm434, %v427, %v431
    %v436 = vand.u32 2147483647, %v360
    %vm437 = vcmp.eq.f32.partialorder %v436, 8.507059e+37
    %v438 = vand.u32 %v360, 2147483648
    %v439 = vor.u32 1.1754944e-38, %v438
    %v440 = vsel %vm437, %v439, %v435
    %v441 = vmul.f32 1.0, %v440
    %v442 = vrcp.pop %v362
    %v443 = vmul.f32 %v362, %v442
    %v444 = vsub.f32 1.0, %v443
    %v445 = vmul.f32 %v442, %v444
    %v446 = vadd.f32 %v442, %v445
    %vm447 = vweird.f32 %v362
    %vm448 = vweird.f32 %v442
    %vm449 = vmor %vm447, %vm448
    %v450 = vsel %vm449, %v442, %v446
    %v451 = vand.u32 2147483647, %v362
    %vm452 = vcmp.eq.f32.partialorder %v451, 8.507059e+37
    %v453 = vand.u32 %v362, 2147483648
    %v454 = vor.u32 1.1754944e-38, %v453
    %v455 = vsel %vm452, %v454, %v450
    %v456 = vmul.f32 1.0, %v455
    %v457 = vrcp.pop %v364
    %v458 = vmul.f32 %v364, %v457
    %v459 = vsub.f32 1.0, %v458
    %v460 = vmul.f32 %v457, %v459
    %v461 = vadd.f32 %v457, %v460
    %vm462 = vweird.f32 %v364
    %vm463 = vweird.f32 %v457
    %vm464 = vmor %vm462, %vm463
    %v465 = vsel %vm464, %v457, %v461
    %v466 = vand.u32 2147483647, %v364
    %vm467 = vcmp.eq.f32.partialorder %v466, 8.507059e+37
    %v468 = vand.u32 %v364, 2147483648
    %v469 = vor.u32 1.1754944e-38, %v468
    %v470 = vsel %vm467, %v469, %v465
    %v471 = vmul.f32 1.0, %v470
    %v472 = vrcp.pop %v366
    %v473 = vmul.f32 %v366, %v472
    %v474 = vsub.f32 1.0, %v473
    %v475 = vmul.f32 %v472, %v474
    %v476 = vadd.f32 %v472, %v475
    %vm477 = vweird.f32 %v366
    %vm478 = vweird.f32 %v472
    %vm479 = vmor %vm477, %vm478
    %v480 = vsel %vm479, %v472, %v476
    %v481 = vand.u32 2147483647, %v366
    %vm482 = vcmp.eq.f32.partialorder %v481, 8.507059e+37
    %v483 = vand.u32 %v366, 2147483648
    %v484 = vor.u32 1.1754944e-38, %v483
    %v485 = vsel %vm482, %v484, %v480
    %v486 = vmul.f32 1.0, %v485
    %v487 = vmul.f32 %v336, %v381
    %v488 = vmul.f32 %v338, %v396
    %v489 = vmul.f32 %v340, %v411
    %v490 = vmul.f32 %v342, %v426
    %v491 = vmul.f32 %v344, %v441
    %v492 = vmul.f32 %v346, %v456
    %v493 = vmul.f32 %v348, %v471
    %v494 = vmul.f32 %v350, %v486
    %495 = vst [vmem:[#allocation2] sm:$0xff] %v487
    %496 = vst [vmem:[#allocation2 + $0x8] sm:$0xff] %v488
    %497 = vst [vmem:[#allocation2 + $0x10] sm:$0xff] %v489
    %498 = vst [vmem:[#allocation2 + $0x18] sm:$0xff] %v490
    %499 = vst [vmem:[#allocation2 + $0x20] sm:$0xff] %v491
    %500 = vst [vmem:[#allocation2 + $0x28] sm:$0xff] %v492
    %501 = vst [vmem:[#allocation2 + $0x30] sm:$0xff] %v493
    %502 = vst [vmem:[#allocation2 + $0x38] sm:$0xff] %v494
    // Predicated region
    $region14: #{tpu_custom_call.1} parent=1 // pred_check
      _
    $region15: #{tpu_custom_call.1} parent=1 // pred_check_branch
      %504 = sbr.rel (0) target = $region17
    $region16: #{tpu_custom_call.1} parent=1 // pred_region
      %506 = vsyncadd [#allocation3], 0
      %s507 = sshll.u32 [#allocation2], 4
      %s508 = int_to_ptr.vmem [resolvable:$true] %s507
      %s509 = sshll.u32 %s3, 4
      %s510 = int_to_ptr.hbm [resolvable:$true] %s509
      %515 = dma.vmem_to_hbm [thread:$0]  %s508, 1024, %s510, [#allocation3], 128, 128, 8
    $region17: #{tpu_custom_call.1} parent=1 // pred_fallthru
      _
    // Predicated region
    $region18: #{tpu_custom_call.1} parent=1 // pred_check
      _
    $region19: #{tpu_custom_call.1} parent=1 // pred_check_branch
      %517 = sbr.rel (0) target = $region21
    $region20: #{tpu_custom_call.1} parent=1 // pred_region
      %519 = dma.done [#allocation3], 1024
    $region21: #{tpu_custom_call.1} parent=1 // pred_fallthru
      _
    %520 = vsyncpa [#allocation3], 1

</llo_original>
